<compile_context>
chip_gen: v6e
topology: v6e:2x2x1
jax: 0.10.0
libtpu: 0.0.40
codegen_flags: <defaults>
</compile_context>

<pallas_src>
import functools

import jax
import jax.numpy as jnp
from jax.experimental import pallas as pl
from jax.experimental.pallas import tpu as pltpu


# -----------------------------------------------------------------------------
# Pallas kernel: whole forward (including the embedding pool) in VMEM.
# -----------------------------------------------------------------------------
def kitchenette_kernel(ids_ref, len_ref, tw1_ref, b1_ref, w2_ref, b2_ref,
                       wd1_ref, bd1_ref, wd2_ref, bd2_ref,
                       wpe_ref, wpd_ref, bp_ref, out_ref):
    B, S = ids_ref.shape
    V = tw1_ref.shape[0]
    H = w2_ref.shape[0]              # true hidden dim (embDim)
    HP = out_ref.shape[1]            # lane-padded hidden dim (128)
    HH = H * H
    f32 = jnp.float32
    bf16 = jnp.bfloat16

    # ---- fused embedding gather + mean pool + first encoder layer -----------
    # counts[b, v] = #{s : ids[b, s] == v}: one wide 3-D compare reduced over S.
    # NOTE: ids outside [0, V) are silently dropped (reference gather would clamp).
    ids = ids_ref[...]
    iota_v = jax.lax.broadcasted_iota(jnp.int32, (B, S, V), 2)
    counts = jnp.sum((ids[:, :, None] == iota_v).astype(f32), axis=1)   # [B, V]

    # pooled @ w1 == inv_len * (counts @ (table @ w1));  table @ w1 pre-folded.
    inv_len = 1.0 / len_ref[...].astype(f32)                            # exact divide, [B,1]
    h = jnp.dot(counts.astype(bf16), tw1_ref[...],
                preferred_element_type=f32) * inv_len + b1_ref[...]
    h = jnp.maximum(h, 0.0)                                             # [B, HP]

    # ---- ElementEncoder.mlp second layer (shared: eQ == eA) -----------------
    e = jnp.maximum(jnp.dot(h[:, :H].astype(bf16), w2_ref[...],
                            preferred_element_type=f32) + b2_ref[...], 0.0)
    e16 = e[:, :H].astype(bf16)                                         # [B, H]

    # ---- deep_encoder on cat([eQ, eA]) with the two weight halves pre-folded -
    d = jnp.maximum(jnp.dot(e16, wd1_ref[...],
                            preferred_element_type=f32) + bd1_ref[...], 0.0)
    dq = jnp.maximum(jnp.dot(d[:, :H].astype(bf16), wd2_ref[...],
                             preferred_element_type=f32) + bd2_ref[...], 0.0)

    # ---- predictor -----------------------------------------------------------
    # Linear (dQ) part + bias.
    acc = jnp.dot(dq[:, :H].astype(bf16), wpd_ref[...],
                  preferred_element_type=f32) + bp_ref[...]             # [B, HP]

    # Quadratic (e ⊗ e) part:  out[b,k] += sum_{i,j} e[b,i] e[b,j] Wp[i*H+j, k].
    # wpe = [wpr2 | E], one fused MXU matmul (N = 2*H*H):
    #   g[b, i*H+k]    = sum_j e[b,j] Wp[i*H+j, k]   (wpr2[j, i*H+k] = Wp[i*H+j, k])
    #   eexp[b, i*H+k] = e[b,i]                      (E[j, i*H+k]    = (i == j))
    ge = jnp.dot(e16, wpe_ref[...], preferred_element_type=f32)         # [B, 2*H*H]
    prod = ge[:, :HH] * ge[:, HH:]                                      # [B, H*H]

    # Sum over i: tree-add the 128-lane-aligned slices, then fold the remaining
    # HP//H blocks of H lanes with XLU lane-rotates (all full-vreg ops).
    parts = [prod[:, v * HP:(v + 1) * HP] for v in range(HH // HP)]
    while len(parts) > 1:
        nxt = [parts[i] + parts[i + 1] for i in range(0, len(parts) - 1, 2)]
        if len(parts) % 2:
            nxt.append(parts[-1])
        parts = nxt
    total = parts[0]                                                    # [B, HP]
    step = HP // 2
    while step >= H:
        total = total + pltpu.roll(total, shift=step, axis=1)
        step //= 2
    # Lanes [0, H) now hold the full quadratic sum; mask the (garbage) pad lanes.
    lane = jax.lax.broadcasted_iota(jnp.int32, (B, HP), 1)
    out_ref[...] = acc + jnp.where(lane < H, total, 0.0)


# -----------------------------------------------------------------------------
# One-time parameter preparation: fold, reorder, lane-pad outputs to 128, bf16.
# -----------------------------------------------------------------------------
def prepare_params(p, hp=128):
    H = p["w1"].shape[1]
    assert hp % H == 0 and (H * H) % hp == 0 and (hp // H) & (hp // H - 1) == 0
    f32, bf = jnp.float32, jnp.bfloat16

    def pad_cols(w):  # zero-pad only the output (last) dim to hp
        return jnp.pad(w, [(0, 0)] * (w.ndim - 1) + [(0, hp - w.shape[-1])])

    # Fold the frozen embedding table into encoder layer 1:
    #   (counts @ table) @ w1 == counts @ (table @ w1)
    tw1 = p["emb_table"] @ p["w1"]                                     # [V, H]

    # deep_encoder layer 1: eQ == eA  =>  cat([e,e]) @ wd1 == e @ (wd1[:H]+wd1[H:])
    wd1_sum = p["wd1"][:H] + p["wd1"][H:2 * H]

    # Predictor quadratic block, reordered:  wpr2[j, i*H + k] = Wp[i*H + j, k]
    w3 = p["wp"][:H * H, :].reshape(H, H, H)                           # [i, j, k]
    wpr2 = jnp.transpose(w3, (1, 0, 2)).reshape(H, H * H)              # [j, i*H + k]
    # 0/1 expander: E[j, i*H + k] = (i == j)  =>  e @ E replicates e[b, i] over k.
    expand = jnp.repeat(jnp.eye(H, dtype=f32), H, axis=1)              # [j, i*H + k]
    wpe = jnp.concatenate([wpr2, expand], axis=1)                      # [H, 2*H*H]

    return dict(
        tw1=pad_cols(tw1).astype(bf),
        b1=pad_cols(p["b1"]).astype(f32),
        w2=pad_cols(p["w2"]).astype(bf),          # K = H (unpadded)
        b2=pad_cols(p["b2"]).astype(f32),
        wd1=pad_cols(wd1_sum).astype(bf),         # K = H (unpadded, folded)
        bd1=pad_cols(p["bd1"]).astype(f32),
        wd2=pad_cols(p["wd2"]).astype(bf),        # K = H (unpadded)
        bd2=pad_cols(p["bd2"]).astype(f32),
        wpe=wpe.astype(bf),                       # [H, 2*H*H], no k-padding
        wpd=pad_cols(p["wp"][H * H:]).astype(bf),
        bp=pad_cols(p["bp"]).astype(f32),
    )


# -----------------------------------------------------------------------------
# Wrapper: single grid-less pallas_call with full-array VMEM blocks.
# -----------------------------------------------------------------------------
@functools.partial(jax.jit, static_argnames=("slice_output",))
def kitchenette_forward(x, sq_lengths, prepped, slice_output=True):
    B = x.shape[0]
    H = prepped["w2"].shape[0]
    HP = prepped["b1"].shape[1]

    args = (x.astype(jnp.int32),
            sq_lengths.astype(jnp.int32).reshape(B, 1),
            prepped["tw1"], prepped["b1"], prepped["w2"], prepped["b2"],
            prepped["wd1"], prepped["bd1"], prepped["wd2"], prepped["bd2"],
            prepped["wpe"], prepped["wpd"], prepped["bp"])

    out_padded = pl.pallas_call(
        kitchenette_kernel,
        out_shape=jax.ShapeDtypeStruct((B, HP), jnp.float32),
        in_specs=[pl.BlockSpec(memory_space=pltpu.MemorySpace.VMEM) for _ in args],
        out_specs=pl.BlockSpec(memory_space=pltpu.MemorySpace.VMEM),
    )(*args)
    # TODO(synk): for non-toy batch sizes add a batch grid (128-512 row blocks over B,
    # constant index_maps for the weights so they stay VMEM-resident,
    # dimension_semantics=("parallel",)) so v7x's two TensorCores are both used.
    # Pad lanes [H:] are exactly zero; perf-sensitive callers can keep the padded
    # output (slice_output=False) and fuse the [:, :H] slice into the consumer.
    return out_padded[:, :H] if slice_output else out_padded


# -----------------------------------------------------------------------------
# Deterministic parameter init (shapes implied by the module's __init__).
# -----------------------------------------------------------------------------
def init_params(key, vocab, din, hidden):
    ks = jax.random.split(key, 11)

    def linear(kw, kb, fan_in, fan_out):
        lim = 1.0 / jnp.sqrt(jnp.float32(fan_in))
        w = jax.random.uniform(kw, (fan_in, fan_out), jnp.float32, -lim, lim)
        b = jax.random.uniform(kb, (1, fan_out), jnp.float32, -lim, lim)
        return w, b

    emb_table = 0.1 * jax.random.normal(ks[0], (vocab, din), jnp.float32)
    emb_table = emb_table.at[0].set(0.0)                                  # padding_idx=0

    w1, b1 = linear(ks[1], ks[2], din, hidden)                            # encoder.mlp[0]
    w2, b2 = linear(ks[3], ks[4], hidden, hidden)                         # encoder.mlp[3]
    wd1, bd1 = linear(ks[5], ks[6], 2 * hidden, hidden)                   # deep_encoder[0]
    wd2, bd2 = linear(ks[7], ks[8], hidden, hidden)                       # deep_encoder[3]
    wp, bp = linear(ks[9], ks[10], hidden * hidden + hidden, hidden)      # predictor

    return dict(emb_table=emb_table, w1=w1, b1=b1, w2=w2, b2=b2,
                wd1=wd1, bd1=bd1, wd2=wd2, bd2=bd2, wp=wp, bp=bp)


# -----------------------------------------------------------------------------
# Pure-JAX reference (mirrors the PyTorch forward literally) for verification.
# -----------------------------------------------------------------------------
def reference_forward(x, sq_lengths, p):
    emb = jnp.take(p["emb_table"], x, axis=0)
    pooled = emb.sum(axis=1) / sq_lengths.astype(jnp.float32)[:, None]

    def mlp(z, w1, b1, w2, b2):
        z = jnp.maximum(z @ w1 + b1, 0.0)
        return jnp.maximum(z @ w2 + b2, 0.0)

    e = mlp(pooled, p["w1"], p["b1"], p["w2"], p["b2"])                   # eQ == eA
    B = e.shape[0]
    wQ = (e[:, :, None] * e[:, None, :]).reshape(B, -1)
    dQ = mlp(jnp.concatenate([e, e], axis=1), p["wd1"], p["bd1"], p["wd2"], p["bd2"])
    feat = jnp.concatenate([wQ, dQ], axis=1)
    return feat @ p["wp"] + p["bp"]


if __name__ == "__main__":
    B, S = 8, 8          # batch, seq_len
    VOCAB = 32           # num_tokens
    DIN = 16             # opts.wVecDim
    HID = 32             # opts.embDim

    key = jax.random.PRNGKey(0)
    k_par, k_x, k_len = jax.random.split(key, 3)

    params = init_params(k_par, VOCAB, DIN, HID)
    prepped = prepare_params(params)
    x = jax.random.randint(k_x, (B, S), 0, VOCAB, dtype=jnp.int32)
    sq_lengths = jax.random.randint(k_len, (B,), 1, S + 1, dtype=jnp.int32)

    out = kitchenette_forward(x, sq_lengths, prepped)
    out = jax.block_until_ready(out)

    ref = reference_forward(x, sq_lengths, params)
    assert out.shape == (B, HID)
    # bf16 weights => relaxed tolerance vs the f32 reference.
    assert jnp.allclose(out, ref, atol=1e-2, rtol=1e-2), "mismatch vs reference"

    print("KERNEL_OK")
</pallas_src>

<mosaic_0001>
module attributes {stable_mosaic.version = 11 : i64} {
  func.func @kitchenette_kernel(%arg0: memref<8x8xi32, #tpu.memory_space<vmem>>, %arg1: memref<8x1xi32, #tpu.memory_space<vmem>>, %arg2: memref<32x128xbf16, #tpu.memory_space<vmem>>, %arg3: memref<1x128xf32, #tpu.memory_space<vmem>>, %arg4: memref<32x128xbf16, #tpu.memory_space<vmem>>, %arg5: memref<1x128xf32, #tpu.memory_space<vmem>>, %arg6: memref<32x128xbf16, #tpu.memory_space<vmem>>, %arg7: memref<1x128xf32, #tpu.memory_space<vmem>>, %arg8: memref<32x128xbf16, #tpu.memory_space<vmem>>, %arg9: memref<1x128xf32, #tpu.memory_space<vmem>>, %arg10: memref<32x2048xbf16, #tpu.memory_space<vmem>>, %arg11: memref<32x128xbf16, #tpu.memory_space<vmem>>, %arg12: memref<1x128xf32, #tpu.memory_space<vmem>>, %arg13: memref<8x128xf32, #tpu.memory_space<vmem>>) attributes {dimension_semantics = [], scalar_prefetch = 0 : i64, scratch_operands = 0 : i64, tpu.core_type = #tpu.core_type<tc>} {
    %c0 = arith.constant 0 : index
    %c0_0 = arith.constant 0 : index
    %0 = vector.load %arg0[%c0, %c0_0] : memref<8x8xi32, #tpu.memory_space<vmem>>, vector<8x8xi32>
    %1 = tpu.iota {dimensions = array<i32: 2>} : vector<8x8x32xi32>
    %2 = vector.shape_cast %0 : vector<8x8xi32> to vector<8x8x1xi32>
    %3 = vector.broadcast %2 : vector<8x8x1xi32> to vector<8x8x32xi32>
    %4 = arith.cmpi eq, %3, %1 : vector<8x8x32xi32>
    %5 = arith.extui %4 : vector<8x8x32xi1> to vector<8x8x32xi32>
    %6 = arith.sitofp %5 : vector<8x8x32xi32> to vector<8x8x32xf32>
    %cst = arith.constant dense<0.000000e+00> : vector<8x32xf32>
    %7 = vector.multi_reduction <add>, %6, %cst [1] : vector<8x8x32xf32> to vector<8x32xf32>
    %c0_1 = arith.constant 0 : index
    %c0_2 = arith.constant 0 : index
    %8 = vector.load %arg1[%c0_1, %c0_2] : memref<8x1xi32, #tpu.memory_space<vmem>>, vector<8x1xi32>
    %9 = arith.sitofp %8 : vector<8x1xi32> to vector<8x1xf32>
    %cst_3 = arith.constant 1.000000e+00 : f32
    %10 = vector.broadcast %cst_3 : f32 to vector<8x1xf32>
    %11 = arith.divf %10, %9 : vector<8x1xf32>
    %12 = arith.truncf %7 : vector<8x32xf32> to vector<8x32xbf16>
    %c0_4 = arith.constant 0 : index
    %c0_5 = arith.constant 0 : index
    %13 = vector.load %arg2[%c0_4, %c0_5] : memref<32x128xbf16, #tpu.memory_space<vmem>>, vector<32x128xbf16>
    %cst_6 = arith.constant dense<0.000000e+00> : vector<8x128xf32>
    %14 = tpu.matmul %12, %13, %cst_6 {dimension_numbers = #tpu.dot_dimension_numbers<[1], [0], [0], [1], [0, 0, 1, 1], [], []>} : vector<8x32xbf16>, vector<32x128xbf16>, vector<8x128xf32> -> vector<8x128xf32>
    %15 = vector.broadcast %11 : vector<8x1xf32> to vector<8x128xf32>
    %16 = arith.mulf %14, %15 : vector<8x128xf32>
    %c0_7 = arith.constant 0 : index
    %c0_8 = arith.constant 0 : index
    %17 = vector.load %arg3[%c0_7, %c0_8] : memref<1x128xf32, #tpu.memory_space<vmem>>, vector<1x128xf32>
    %18 = vector.broadcast %17 : vector<1x128xf32> to vector<8x128xf32>
    %19 = arith.addf %16, %18 : vector<8x128xf32>
    %cst_9 = arith.constant 0.000000e+00 : f32
    %20 = vector.broadcast %cst_9 : f32 to vector<8x128xf32>
    %21 = arith.maximumf %19, %20 : vector<8x128xf32>
    %22 = vector.extract_strided_slice %21 {offsets = [0, 0], sizes = [8, 32], strides = [1, 1]} : vector<8x128xf32> to vector<8x32xf32>
    %23 = arith.truncf %22 : vector<8x32xf32> to vector<8x32xbf16>
    %c0_10 = arith.constant 0 : index
    %c0_11 = arith.constant 0 : index
    %24 = vector.load %arg4[%c0_10, %c0_11] : memref<32x128xbf16, #tpu.memory_space<vmem>>, vector<32x128xbf16>
    %cst_12 = arith.constant dense<0.000000e+00> : vector<8x128xf32>
    %25 = tpu.matmul %23, %24, %cst_12 {dimension_numbers = #tpu.dot_dimension_numbers<[1], [0], [0], [1], [0, 0, 1, 1], [], []>} : vector<8x32xbf16>, vector<32x128xbf16>, vector<8x128xf32> -> vector<8x128xf32>
    %c0_13 = arith.constant 0 : index
    %c0_14 = arith.constant 0 : index
    %26 = vector.load %arg5[%c0_13, %c0_14] : memref<1x128xf32, #tpu.memory_space<vmem>>, vector<1x128xf32>
    %27 = vector.broadcast %26 : vector<1x128xf32> to vector<8x128xf32>
    %28 = arith.addf %25, %27 : vector<8x128xf32>
    %cst_15 = arith.constant 0.000000e+00 : f32
    %29 = vector.broadcast %cst_15 : f32 to vector<8x128xf32>
    %30 = arith.maximumf %28, %29 : vector<8x128xf32>
    %31 = vector.extract_strided_slice %30 {offsets = [0, 0], sizes = [8, 32], strides = [1, 1]} : vector<8x128xf32> to vector<8x32xf32>
    %32 = arith.truncf %31 : vector<8x32xf32> to vector<8x32xbf16>
    %c0_16 = arith.constant 0 : index
    %c0_17 = arith.constant 0 : index
    %33 = vector.load %arg6[%c0_16, %c0_17] : memref<32x128xbf16, #tpu.memory_space<vmem>>, vector<32x128xbf16>
    %cst_18 = arith.constant dense<0.000000e+00> : vector<8x128xf32>
    %34 = tpu.matmul %32, %33, %cst_18 {dimension_numbers = #tpu.dot_dimension_numbers<[1], [0], [0], [1], [0, 0, 1, 1], [], []>} : vector<8x32xbf16>, vector<32x128xbf16>, vector<8x128xf32> -> vector<8x128xf32>
    %c0_19 = arith.constant 0 : index
    %c0_20 = arith.constant 0 : index
    %35 = vector.load %arg7[%c0_19, %c0_20] : memref<1x128xf32, #tpu.memory_space<vmem>>, vector<1x128xf32>
    %36 = vector.broadcast %35 : vector<1x128xf32> to vector<8x128xf32>
    %37 = arith.addf %34, %36 : vector<8x128xf32>
    %cst_21 = arith.constant 0.000000e+00 : f32
    %38 = vector.broadcast %cst_21 : f32 to vector<8x128xf32>
    %39 = arith.maximumf %37, %38 : vector<8x128xf32>
    %40 = vector.extract_strided_slice %39 {offsets = [0, 0], sizes = [8, 32], strides = [1, 1]} : vector<8x128xf32> to vector<8x32xf32>
    %41 = arith.truncf %40 : vector<8x32xf32> to vector<8x32xbf16>
    %c0_22 = arith.constant 0 : index
    %c0_23 = arith.constant 0 : index
    %42 = vector.load %arg8[%c0_22, %c0_23] : memref<32x128xbf16, #tpu.memory_space<vmem>>, vector<32x128xbf16>
    %cst_24 = arith.constant dense<0.000000e+00> : vector<8x128xf32>
    %43 = tpu.matmul %41, %42, %cst_24 {dimension_numbers = #tpu.dot_dimension_numbers<[1], [0], [0], [1], [0, 0, 1, 1], [], []>} : vector<8x32xbf16>, vector<32x128xbf16>, vector<8x128xf32> -> vector<8x128xf32>
    %c0_25 = arith.constant 0 : index
    %c0_26 = arith.constant 0 : index
    %44 = vector.load %arg9[%c0_25, %c0_26] : memref<1x128xf32, #tpu.memory_space<vmem>>, vector<1x128xf32>
    %45 = vector.broadcast %44 : vector<1x128xf32> to vector<8x128xf32>
    %46 = arith.addf %43, %45 : vector<8x128xf32>
    %cst_27 = arith.constant 0.000000e+00 : f32
    %47 = vector.broadcast %cst_27 : f32 to vector<8x128xf32>
    %48 = arith.maximumf %46, %47 : vector<8x128xf32>
    %49 = vector.extract_strided_slice %48 {offsets = [0, 0], sizes = [8, 32], strides = [1, 1]} : vector<8x128xf32> to vector<8x32xf32>
    %50 = arith.truncf %49 : vector<8x32xf32> to vector<8x32xbf16>
    %c0_28 = arith.constant 0 : index
    %c0_29 = arith.constant 0 : index
    %51 = vector.load %arg11[%c0_28, %c0_29] : memref<32x128xbf16, #tpu.memory_space<vmem>>, vector<32x128xbf16>
    %cst_30 = arith.constant dense<0.000000e+00> : vector<8x128xf32>
    %52 = tpu.matmul %50, %51, %cst_30 {dimension_numbers = #tpu.dot_dimension_numbers<[1], [0], [0], [1], [0, 0, 1, 1], [], []>} : vector<8x32xbf16>, vector<32x128xbf16>, vector<8x128xf32> -> vector<8x128xf32>
    %c0_31 = arith.constant 0 : index
    %c0_32 = arith.constant 0 : index
    %53 = vector.load %arg12[%c0_31, %c0_32] : memref<1x128xf32, #tpu.memory_space<vmem>>, vector<1x128xf32>
    %54 = vector.broadcast %53 : vector<1x128xf32> to vector<8x128xf32>
    %55 = arith.addf %52, %54 : vector<8x128xf32>
    %c0_33 = arith.constant 0 : index
    %c0_34 = arith.constant 0 : index
    %56 = vector.load %arg10[%c0_33, %c0_34] : memref<32x2048xbf16, #tpu.memory_space<vmem>>, vector<32x2048xbf16>
    %cst_35 = arith.constant dense<0.000000e+00> : vector<8x2048xf32>
    %57 = tpu.matmul %32, %56, %cst_35 {dimension_numbers = #tpu.dot_dimension_numbers<[1], [0], [0], [1], [0, 0, 1, 1], [], []>} : vector<8x32xbf16>, vector<32x2048xbf16>, vector<8x2048xf32> -> vector<8x2048xf32>
    %58 = vector.extract_strided_slice %57 {offsets = [0, 0], sizes = [8, 1024], strides = [1, 1]} : vector<8x2048xf32> to vector<8x1024xf32>
    %59 = vector.extract_strided_slice %57 {offsets = [0, 1024], sizes = [8, 1024], strides = [1, 1]} : vector<8x2048xf32> to vector<8x1024xf32>
    %60 = arith.mulf %58, %59 : vector<8x1024xf32>
    %61 = vector.extract_strided_slice %60 {offsets = [0, 0], sizes = [8, 128], strides = [1, 1]} : vector<8x1024xf32> to vector<8x128xf32>
    %62 = vector.extract_strided_slice %60 {offsets = [0, 128], sizes = [8, 128], strides = [1, 1]} : vector<8x1024xf32> to vector<8x128xf32>
    %63 = vector.extract_strided_slice %60 {offsets = [0, 256], sizes = [8, 128], strides = [1, 1]} : vector<8x1024xf32> to vector<8x128xf32>
    %64 = vector.extract_strided_slice %60 {offsets = [0, 384], sizes = [8, 128], strides = [1, 1]} : vector<8x1024xf32> to vector<8x128xf32>
    %65 = vector.extract_strided_slice %60 {offsets = [0, 512], sizes = [8, 128], strides = [1, 1]} : vector<8x1024xf32> to vector<8x128xf32>
    %66 = vector.extract_strided_slice %60 {offsets = [0, 640], sizes = [8, 128], strides = [1, 1]} : vector<8x1024xf32> to vector<8x128xf32>
    %67 = vector.extract_strided_slice %60 {offsets = [0, 768], sizes = [8, 128], strides = [1, 1]} : vector<8x1024xf32> to vector<8x128xf32>
    %68 = vector.extract_strided_slice %60 {offsets = [0, 896], sizes = [8, 128], strides = [1, 1]} : vector<8x1024xf32> to vector<8x128xf32>
    %69 = arith.addf %61, %62 : vector<8x128xf32>
    %70 = arith.addf %63, %64 : vector<8x128xf32>
    %71 = arith.addf %65, %66 : vector<8x128xf32>
    %72 = arith.addf %67, %68 : vector<8x128xf32>
    %73 = arith.addf %69, %70 : vector<8x128xf32>
    %74 = arith.addf %71, %72 : vector<8x128xf32>
    %75 = arith.addf %73, %74 : vector<8x128xf32>
    %c64_i32 = arith.constant 64 : i32
    %76 = tpu.dynamic_rotate %75 by %c64_i32 dim 1 : vector<8x128xf32>, i32 -> vector<8x128xf32>
    %77 = arith.addf %75, %76 : vector<8x128xf32>
    %c32_i32 = arith.constant 32 : i32
    %78 = tpu.dynamic_rotate %77 by %c32_i32 dim 1 : vector<8x128xf32>, i32 -> vector<8x128xf32>
    %79 = arith.addf %77, %78 : vector<8x128xf32>
    %80 = tpu.iota {dimensions = array<i32: 1>} : vector<8x128xi32>
    %c32_i32_36 = arith.constant 32 : i32
    %81 = vector.broadcast %c32_i32_36 : i32 to vector<8x128xi32>
    %82 = arith.cmpi slt, %80, %81 : vector<8x128xi32>
    %cst_37 = arith.constant 0.000000e+00 : f32
    %83 = vector.broadcast %cst_37 : f32 to vector<8x128xf32>
    %84 = arith.select %82, %79, %83 : vector<8x128xi1>, vector<8x128xf32>
    %85 = arith.addf %55, %84 : vector<8x128xf32>
    %c0_38 = arith.constant 0 : index
    %c0_39 = arith.constant 0 : index
    %86 = vector.load %arg13[%c0_38, %c0_39] : memref<8x128xf32, #tpu.memory_space<vmem>>, vector<8x128xf32>
    tpu.vector_store %arg13[%c0_38, %c0_39], %85 {strides = array<i32>} : memref<8x128xf32, #tpu.memory_space<vmem>>, vector<8x128xf32>,
    return
  }
}

</mosaic_0001>

<llo_original>
// kernel: kitchenette_forward.1
$region0: #{kitchenette_forward.1}
  #allocation0 [shape = 'u32[]', space=smem, size = 0x4, offset = 0x4, fixed_abs, tag = 'smem constant byte address 0x4 - core index']
  #allocation1 [shape = 'u32[144,128]{1,0:T(1,128)}', space=vmem, size = 0x12000, scoped, tag = 'internal scratch']
  %s0 = inlined_call_operand.hbm [shape: s32[8,8], index: 0, kind: input, shape index: {}]
  %s1 = inlined_call_operand.vmem [shape: s32[8,1], index: 1, kind: input, shape index: {}]
  %s2 = inlined_call_operand.vmem [shape: bf16[32,128], index: 2, kind: input, shape index: {}]
  %s3 = inlined_call_operand.vmem [shape: f32[1,128], index: 3, kind: input, shape index: {}]
  %s4 = inlined_call_operand.hbm [shape: bf16[32,128], index: 4, kind: input, shape index: {}]
  %s5 = inlined_call_operand.vmem [shape: f32[1,128], index: 5, kind: input, shape index: {}]
  %s6 = inlined_call_operand.hbm [shape: bf16[32,128], index: 6, kind: input, shape index: {}]
  %s7 = inlined_call_operand.vmem [shape: f32[1,128], index: 7, kind: input, shape index: {}]
  %s8 = inlined_call_operand.hbm [shape: bf16[32,128], index: 8, kind: input, shape index: {}]
  %s9 = inlined_call_operand.vmem [shape: f32[1,128], index: 9, kind: input, shape index: {}]
  %s10 = inlined_call_operand.hbm [shape: bf16[32,2048], index: 10, kind: input, shape index: {}]
  %s11 = inlined_call_operand.hbm [shape: bf16[32,128], index: 11, kind: input, shape index: {}]
  %s12 = inlined_call_operand.vmem [shape: f32[1,128], index: 12, kind: input, shape index: {}]
  %s13 = inlined_call_operand.hbm [shape: f32[8,128], index: 13, kind: output, shape index: {}]
  %s14 = sld [smem:[#allocation0]]
  $region86: #{kitchenette_forward.1} parent=0
    _
  %s16 = ssub.s32 1, %s14
  %s17 = scalar_select 0, %s16, %s14
  $region1: #{kitchenette_forward.1} parent=0
    #allocation2 [shape = 'u8[4096]{0}', space=vmem, size = 0x1000, scoped, tag = 'input window, operand 0, single buffered']
    #allocation3 [shape = 's32[1]{0}', space=sflag, size = 0x4, scoped, tag = 'scoped memory for kitchenette_forward.1']
    #allocation4 [shape = 's32[1]{0}', space=sflag, size = 0x4, scoped, tag = 'scoped memory for kitchenette_forward.1']
    #allocation5 [shape = 'u8[8192]{0}', space=vmem, size = 0x2000, scoped, tag = 'input window, operand 4, single buffered']
    #allocation6 [shape = 's32[1]{0}', space=sflag, size = 0x4, scoped, tag = 'scoped memory for kitchenette_forward.1']
    #allocation7 [shape = 'u8[8192]{0}', space=vmem, size = 0x2000, scoped, tag = 'input window, operand 6, single buffered']
    #allocation8 [shape = 'u8[8192]{0}', space=vmem, size = 0x2000, scoped, tag = 'input window, operand 8, single buffered']
    #allocation9 [shape = 's32[1]{0}', space=sflag, size = 0x4, scoped, tag = 'scoped memory for kitchenette_forward.1']
    #allocation10 [shape = 'u8[131072]{0}', space=vmem, size = 0x20000, scoped, tag = 'input window, operand 10, single buffered']
    #allocation11 [shape = 'u8[8192]{0}', space=vmem, size = 0x2000, scoped, tag = 'input window, operand 11, single buffered']
    #allocation12 [shape = 's32[1]{0}', space=sflag, size = 0x4, scoped, tag = 'scoped memory for kitchenette_forward.1']
    #allocation13 [shape = 'u8[4096]{0}', space=vmem, size = 0x1000, scoped, tag = 'output window, operand 0, single buffered']
    %18 = vsyncpa [#allocation3], 0
    %19 = vsyncpa [#allocation6], 0
    %20 = vsyncpa [#allocation9], 0
    %21 = vsyncpa [#allocation12], 0
    %22 = vsyncpa [#allocation4], 0
    // Predicated region
    $region2: #{kitchenette_forward.1} parent=1 // pred_check
      _
    $region3: #{kitchenette_forward.1} parent=1 // pred_check_branch
      %24 = sbr.rel (0) target = $region5
    $region4: #{kitchenette_forward.1} parent=1 // pred_region
      %s26 = ssub.s32 128, 128
      %27 = vsyncadd [#allocation3], %s26
      %s29 = sshll.u32 [#allocation2], 4
      %s30 = int_to_ptr.vmem [resolvable:$true] %s29
      %32 = dma.hbm_to_vmem [thread:$0]  %s0, 128, %s30, [#allocation3]
    $region5: #{kitchenette_forward.1} parent=1 // pred_fallthru
      _
    // Predicated region
    $region6: #{kitchenette_forward.1} parent=1 // pred_check
      _
    $region7: #{kitchenette_forward.1} parent=1 // pred_check_branch
      %34 = sbr.rel (0) target = $region9
    $region8: #{kitchenette_forward.1} parent=1 // pred_region
      _
    $region9: #{kitchenette_forward.1} parent=1 // pred_fallthru
      _
    // Predicated region
    $region10: #{kitchenette_forward.1} parent=1 // pred_check
      _
    $region11: #{kitchenette_forward.1} parent=1 // pred_check_branch
      %36 = sbr.rel (0) target = $region13
    $region12: #{kitchenette_forward.1} parent=1 // pred_region
      _
    $region13: #{kitchenette_forward.1} parent=1 // pred_fallthru
      _
    // Predicated region
    $region14: #{kitchenette_forward.1} parent=1 // pred_check
      _
    $region15: #{kitchenette_forward.1} parent=1 // pred_check_branch
      %38 = sbr.rel (0) target = $region17
    $region16: #{kitchenette_forward.1} parent=1 // pred_region
      _
    $region17: #{kitchenette_forward.1} parent=1 // pred_fallthru
      _
    // Predicated region
    $region18: #{kitchenette_forward.1} parent=1 // pred_check
      _
    $region19: #{kitchenette_forward.1} parent=1 // pred_check_branch
      %40 = sbr.rel (0) target = $region21
    $region20: #{kitchenette_forward.1} parent=1 // pred_region
      %s42 = ssub.s32 256, 256
      %43 = vsyncadd [#allocation6], %s42
      %s44 = sshll.u32 [#allocation5], 4
      %s45 = int_to_ptr.vmem [resolvable:$true] %s44
      %50 = dma.hbm_to_vmem [thread:$0]  %s4, 256, %s45, [#allocation6], 64, 64, 4
    $region21: #{kitchenette_forward.1} parent=1 // pred_fallthru
      _
    // Predicated region
    $region22: #{kitchenette_forward.1} parent=1 // pred_check
      _
    $region23: #{kitchenette_forward.1} parent=1 // pred_check_branch
      %52 = sbr.rel (0) target = $region25
    $region24: #{kitchenette_forward.1} parent=1 // pred_region
      _
    $region25: #{kitchenette_forward.1} parent=1 // pred_fallthru
      _
    // Predicated region
    $region26: #{kitchenette_forward.1} parent=1 // pred_check
      _
    $region27: #{kitchenette_forward.1} parent=1 // pred_check_branch
      %54 = sbr.rel (0) target = $region29
    $region28: #{kitchenette_forward.1} parent=1 // pred_region
      %s56 = ssub.s32 256, 256
      %57 = vsyncadd [#allocation6], %s56
      %s58 = sshll.u32 [#allocation7], 4
      %s59 = int_to_ptr.vmem [resolvable:$true] %s58
      %64 = dma.hbm_to_vmem [thread:$0]  %s6, 256, %s59, [#allocation6], 64, 64, 4
    $region29: #{kitchenette_forward.1} parent=1 // pred_fallthru
      _
    // Predicated region
    $region30: #{kitchenette_forward.1} parent=1 // pred_check
      _
    $region31: #{kitchenette_forward.1} parent=1 // pred_check_branch
      %66 = sbr.rel (0) target = $region33
    $region32: #{kitchenette_forward.1} parent=1 // pred_region
      _
    $region33: #{kitchenette_forward.1} parent=1 // pred_fallthru
      _
    // Predicated region
    $region34: #{kitchenette_forward.1} parent=1 // pred_check
      _
    $region35: #{kitchenette_forward.1} parent=1 // pred_check_branch
      %68 = sbr.rel (0) target = $region37
    $region36: #{kitchenette_forward.1} parent=1 // pred_region
      %s70 = ssub.s32 256, 256
      %71 = vsyncadd [#allocation9], %s70
      %s72 = sshll.u32 [#allocation8], 4
      %s73 = int_to_ptr.vmem [resolvable:$true] %s72
      %78 = dma.hbm_to_vmem [thread:$0]  %s8, 256, %s73, [#allocation9], 64, 64, 4
    $region37: #{kitchenette_forward.1} parent=1 // pred_fallthru
      _
    // Predicated region
    $region38: #{kitchenette_forward.1} parent=1 // pred_check
      _
    $region39: #{kitchenette_forward.1} parent=1 // pred_check_branch
      %80 = sbr.rel (0) target = $region41
    $region40: #{kitchenette_forward.1} parent=1 // pred_region
      _
    $region41: #{kitchenette_forward.1} parent=1 // pred_fallthru
      _
    // Predicated region
    $region42: #{kitchenette_forward.1} parent=1 // pred_check
      _
    $region43: #{kitchenette_forward.1} parent=1 // pred_check_branch
      %82 = sbr.rel (0) target = $region45
    $region44: #{kitchenette_forward.1} parent=1 // pred_region
      %s84 = ssub.s32 4096, 4096
      %85 = vsyncadd [#allocation9], %s84
      %s86 = sshll.u32 [#allocation10], 4
      %s87 = int_to_ptr.vmem [resolvable:$true] %s86
      %92 = dma.hbm_to_vmem [thread:$0]  %s10, 4096, %s87, [#allocation9], 1024, 1024, 64
    $region45: #{kitchenette_forward.1} parent=1 // pred_fallthru
      _
    // Predicated region
    $region46: #{kitchenette_forward.1} parent=1 // pred_check
      _
    $region47: #{kitchenette_forward.1} parent=1 // pred_check_branch
      %94 = sbr.rel (0) target = $region49
    $region48: #{kitchenette_forward.1} parent=1 // pred_region
      %s96 = ssub.s32 256, 256
      %97 = vsyncadd [#allocation12], %s96
      %s98 = sshll.u32 [#allocation11], 4
      %s99 = int_to_ptr.vmem [resolvable:$true] %s98
      %104 = dma.hbm_to_vmem [thread:$0]  %s11, 256, %s99, [#allocation12], 64, 64, 4
    $region49: #{kitchenette_forward.1} parent=1 // pred_fallthru
      _
    // Predicated region
    $region50: #{kitchenette_forward.1} parent=1 // pred_check
      _
    $region51: #{kitchenette_forward.1} parent=1 // pred_check_branch
      %106 = sbr.rel (0) target = $region53
    $region52: #{kitchenette_forward.1} parent=1 // pred_region
      _
    $region53: #{kitchenette_forward.1} parent=1 // pred_fallthru
      _
    // Predicated region
    $region54: #{kitchenette_forward.1} parent=1 // pred_check
      _
    $region55: #{kitchenette_forward.1} parent=1 // pred_check_branch
      %108 = sbr.rel (0) target = $region57
    $region56: #{kitchenette_forward.1} parent=1 // pred_region
      %109 = dma.done [#allocation3], 128
    $region57: #{kitchenette_forward.1} parent=1 // pred_fallthru
      _
    // Predicated region
    $region58: #{kitchenette_forward.1} parent=1 // pred_check
      _
    $region59: #{kitchenette_forward.1} parent=1 // pred_check_branch
      %111 = sbr.rel (0) target = $region61
    $region60: #{kitchenette_forward.1} parent=1 // pred_region
      %112 = dma.done [#allocation6], 256
    $region61: #{kitchenette_forward.1} parent=1 // pred_fallthru
      _
    // Predicated region
    $region62: #{kitchenette_forward.1} parent=1 // pred_check
      _
    $region63: #{kitchenette_forward.1} parent=1 // pred_check_branch
      %114 = sbr.rel (0) target = $region65
    $region64: #{kitchenette_forward.1} parent=1 // pred_region
      %115 = dma.done [#allocation6], 256
    $region65: #{kitchenette_forward.1} parent=1 // pred_fallthru
      _
    // Predicated region
    $region66: #{kitchenette_forward.1} parent=1 // pred_check
      _
    $region67: #{kitchenette_forward.1} parent=1 // pred_check_branch
      %117 = sbr.rel (0) target = $region69
    $region68: #{kitchenette_forward.1} parent=1 // pred_region
      %118 = dma.done [#allocation9], 256
    $region69: #{kitchenette_forward.1} parent=1 // pred_fallthru
      _
    // Predicated region
    $region70: #{kitchenette_forward.1} parent=1 // pred_check
      _
    $region71: #{kitchenette_forward.1} parent=1 // pred_check_branch
      %120 = sbr.rel (0) target = $region73
    $region72: #{kitchenette_forward.1} parent=1 // pred_region
      %121 = dma.done [#allocation9], 4096
    $region73: #{kitchenette_forward.1} parent=1 // pred_fallthru
      _
    // Predicated region
    $region74: #{kitchenette_forward.1} parent=1 // pred_check
      _
    $region75: #{kitchenette_forward.1} parent=1 // pred_check_branch
      %123 = sbr.rel (0) target = $region77
    $region76: #{kitchenette_forward.1} parent=1 // pred_region
      %124 = dma.done [#allocation12], 256
    $region77: #{kitchenette_forward.1} parent=1 // pred_fallthru
      _
    %v126 = vld [vmem:[#allocation2] sm:$0xff]
    %v127 = vlaneseq
    %v128 = vand.u32 %v127, 127
    %v129 = vlaneseq
    %v130 = vshrl.u32 %v129, 7
    %v131 = vsub.s32 0, %v130
    %v132 = vrot.slane %v126, %v131
    %134 = vbcast.lane.b32.xlu0 %v132, 256
    %v135 = vpop.permute.xlu0 %134
    %v136 = vlaneseq
    %v137 = vshrl.u32 %v136, 7
    %v138 = vsub.s32 1, %v137
    %v139 = vrot.slane %v126, %v138
    %141 = vbcast.lane.b32.xlu0 %v139, 256
    %v142 = vpop.permute.xlu0 %141
    %v143 = vlaneseq
    %v144 = vshrl.u32 %v143, 7
    %v145 = vsub.s32 2, %v144
    %v146 = vrot.slane %v126, %v145
    %148 = vbcast.lane.b32.xlu0 %v146, 256
    %v149 = vpop.permute.xlu0 %148
    %v150 = vlaneseq
    %v151 = vshrl.u32 %v150, 7
    %v152 = vsub.s32 3, %v151
    %v153 = vrot.slane %v126, %v152
    %155 = vbcast.lane.b32.xlu0 %v153, 256
    %v156 = vpop.permute.xlu0 %155
    %v157 = vlaneseq
    %v158 = vshrl.u32 %v157, 7
    %v159 = vsub.s32 4, %v158
    %v160 = vrot.slane %v126, %v159
    %162 = vbcast.lane.b32.xlu0 %v160, 256
    %v163 = vpop.permute.xlu0 %162
    %v164 = vlaneseq
    %v165 = vshrl.u32 %v164, 7
    %v166 = vsub.s32 5, %v165
    %v167 = vrot.slane %v126, %v166
    %169 = vbcast.lane.b32.xlu0 %v167, 256
    %v170 = vpop.permute.xlu0 %169
    %v171 = vlaneseq
    %v172 = vshrl.u32 %v171, 7
    %v173 = vsub.s32 6, %v172
    %v174 = vrot.slane %v126, %v173
    %176 = vbcast.lane.b32.xlu0 %v174, 256
    %v177 = vpop.permute.xlu0 %176
    %v178 = vlaneseq
    %v179 = vshrl.u32 %v178, 7
    %v180 = vsub.s32 7, %v179
    %v181 = vrot.slane %v126, %v180
    %183 = vbcast.lane.b32.xlu0 %v181, 256
    %v184 = vpop.permute.xlu0 %183
    %vm185 = vcmp.eq.s32.totalorder %v135, %v128
    %vm186 = vcmp.eq.s32.totalorder %v142, %v128
    %vm187 = vcmp.eq.s32.totalorder %v149, %v128
    %vm188 = vcmp.eq.s32.totalorder %v156, %v128
    %vm189 = vcmp.eq.s32.totalorder %v163, %v128
    %vm190 = vcmp.eq.s32.totalorder %v170, %v128
    %vm191 = vcmp.eq.s32.totalorder %v177, %v128
    %vm192 = vcmp.eq.s32.totalorder %v184, %v128
    %v193 = vsel %vm185, 1, 0
    %v194 = vsel %vm186, 1, 0
    %v195 = vsel %vm187, 1, 0
    %v196 = vsel %vm188, 1, 0
    %v197 = vsel %vm189, 1, 0
    %v198 = vsel %vm190, 1, 0
    %v199 = vsel %vm191, 1, 0
    %v200 = vsel %vm192, 1, 0
    %v201 = vcvt.s32.f32 %v193
    %v202 = vcvt.s32.f32 %v194
    %v203 = vcvt.s32.f32 %v195
    %v204 = vcvt.s32.f32 %v196
    %v205 = vcvt.s32.f32 %v197
    %v206 = vcvt.s32.f32 %v198
    %v207 = vcvt.s32.f32 %v199
    %v208 = vcvt.s32.f32 %v200
    %vm209 = vcmask 261120
    %v210 = vsel %vm209, %v201, 0.0
    %v211 = vrot.slane %v210, 4
    %v212 = vadd.f32 %v210, %v211
    %v213 = vrot.slane %v212, 2
    %v214 = vadd.f32 %v212, %v213
    %v215 = vrot.slane %v214, 1
    %v216 = vadd.f32 %v214, %v215
    %v217 = vsel %vm209, %v202, 0.0
    %v218 = vrot.slane %v217, 4
    %v219 = vadd.f32 %v217, %v218
    %v220 = vrot.slane %v219, 2
    %v221 = vadd.f32 %v219, %v220
    %v222 = vrot.slane %v221, 1
    %v223 = vadd.f32 %v221, %v222
    %v224 = vsel %vm209, %v203, 0.0
    %v225 = vrot.slane %v224, 4
    %v226 = vadd.f32 %v224, %v225
    %v227 = vrot.slane %v226, 2
    %v228 = vadd.f32 %v226, %v227
    %v229 = vrot.slane %v228, 1
    %v230 = vadd.f32 %v228, %v229
    %v231 = vsel %vm209, %v204, 0.0
    %v232 = vrot.slane %v231, 4
    %v233 = vadd.f32 %v231, %v232
    %v234 = vrot.slane %v233, 2
    %v235 = vadd.f32 %v233, %v234
    %v236 = vrot.slane %v235, 1
    %v237 = vadd.f32 %v235, %v236
    %v238 = vsel %vm209, %v205, 0.0
    %v239 = vrot.slane %v238, 4
    %v240 = vadd.f32 %v238, %v239
    %v241 = vrot.slane %v240, 2
    %v242 = vadd.f32 %v240, %v241
    %v243 = vrot.slane %v242, 1
    %v244 = vadd.f32 %v242, %v243
    %v245 = vsel %vm209, %v206, 0.0
    %v246 = vrot.slane %v245, 4
    %v247 = vadd.f32 %v245, %v246
    %v248 = vrot.slane %v247, 2
    %v249 = vadd.f32 %v247, %v248
    %v250 = vrot.slane %v249, 1
    %v251 = vadd.f32 %v249, %v250
    %v252 = vsel %vm209, %v207, 0.0
    %v253 = vrot.slane %v252, 4
    %v254 = vadd.f32 %v252, %v253
    %v255 = vrot.slane %v254, 2
    %v256 = vadd.f32 %v254, %v255
    %v257 = vrot.slane %v256, 1
    %v258 = vadd.f32 %v256, %v257
    %v259 = vsel %vm209, %v208, 0.0
    %v260 = vrot.slane %v259, 4
    %v261 = vadd.f32 %v259, %v260
    %v262 = vrot.slane %v261, 2
    %v263 = vadd.f32 %v261, %v262
    %v264 = vrot.slane %v263, 1
    %v265 = vadd.f32 %v263, %v264
    %v266 = vld [vmem:[%s1] sm:$0xff]
    %v267 = vcvt.s32.f32 %v266
    %v268 = vrcp.pop %v267
    %v269 = vmul.f32 1.0, %v268
    %v270 = vpack.c.bf16 %v216, %v216
    %v271 = vpack.c.bf16 %v223, %v223
    %v272 = vpack.c.bf16 %v230, %v230
    %v273 = vpack.c.bf16 %v237, %v237
    %v274 = vpack.c.bf16 %v244, %v244
    %v275 = vpack.c.bf16 %v251, %v251
    %v276 = vpack.c.bf16 %v258, %v258
    %v277 = vpack.c.bf16 %v265, %v265
    %v278 = vld [vmem:[%s2] sm:$0xf]
    %v279 = vld [vmem:[%s2 + $0x4] sm:$0xf]
    %v280 = vld [vmem:[%s2 + $0x8] sm:$0xf]
    %v281 = vld [vmem:[%s2 + $0xc] sm:$0xf]
    %v290 = vunpack.c.l.b16 %v270
    %v291 = vunpack.c.l.b16 %v271
    %v292 = vunpack.c.l.b16 %v272
    %v293 = vunpack.c.l.b16 %v273
    %v294 = vunpack.c.l.b16 %v274
    %v295 = vunpack.c.l.b16 %v275
    %v296 = vunpack.c.l.b16 %v276
    %v297 = vunpack.c.l.b16 %v277
    %vm298 = vcmask 1041409
    %v299 = vsel %vm298, %v291, %v290
    %vm300 = vcmask 1042434
    %v301 = vsel %vm300, %v292, %v299
    %vm302 = vcmask 1043459
    %v303 = vsel %vm302, %v293, %v301
    %vm304 = vcmask 1044484
    %v305 = vsel %vm304, %v294, %v303
    %vm306 = vcmask 1045509
    %v307 = vsel %vm306, %v295, %v305
    %vm308 = vcmask 1046534
    %v309 = vsel %vm308, %v296, %v307
    %vm310 = vcmask 1047559
    %v311 = vsel %vm310, %v297, %v309
    %v312 = vpack.c.b16 %v311, %v311
    %v317 = vunpack.c.l.b16 %v278
    %v318 = vunpack.c.l.b16 %v279
    %v319 = vunpack.c.l.b16 %v280
    %v320 = vunpack.c.l.b16 %v281
    %v321 = vpack.c.b16 %v318, %v317
    %v322 = vpack.c.b16 %v320, %v319
    %v326 = vsel %vm209, %v312, 0
    %328 = vmatprep.subr.bf16.mxu0 0
    %329 = vmatpush1.bf16.msra.mxu0 0
    %330 = vmatprep.subr.bf16.mxu0 0
    %331 = vmatpush1.bf16.msra.mxu0 0
    %332 = vmatprep.subr.bf16.mxu0 0
    %333 = vmatpush1.bf16.msra.mxu0 0
    %334 = vmatprep.subr.bf16.mxu0 0
    %335 = vmatpush1.bf16.msra.mxu0 0
    %336 = vmatprep.subr.bf16.mxu0 0
    %337 = vmatpush1.bf16.msra.mxu0 0
    %338 = vmatprep.subr.bf16.mxu0 0
    %339 = vmatpush1.bf16.msra.mxu0 0
    %340 = vmatprep.subr.bf16.mxu0 0
    %341 = vmatpush1.bf16.msra.mxu0 %v322
    %342 = vmatprep.subr.bf16.mxu0 0
    %343 = vmatpush1.bf16.msra.mxu0 %v321
    %344 = vmatprep.subr.bf16.mxu0 0
    %345 = vmatpush2.bf16.msra.mxu0 0
    %346 = vmatprep.subr.bf16.mxu0 0
    %347 = vmatpush2.bf16.msra.mxu0 0
    %348 = vmatprep.subr.bf16.mxu0 0
    %349 = vmatpush2.bf16.msra.mxu0 0
    %350 = vmatprep.subr.bf16.mxu0 0
    %351 = vmatpush2.bf16.msra.mxu0 0
    %352 = vmatprep.subr.bf16.mxu0 0
    %353 = vmatpush2.bf16.msra.mxu0 0
    %354 = vmatprep.subr.bf16.mxu0 0
    %355 = vmatpush2.bf16.msra.mxu0 0
    %356 = vmatprep.subr.bf16.mxu0 0
    %357 = vmatpush2.bf16.msra.mxu0 0
    %358 = vmatprep.subr.bf16.mxu0 0
    %359 = vmatpush2.bf16.msra.mxu0 0
    %360 = vmatprep.mubr.bf16.mxu0 0
    %361 = vmatmul.mubr.bf16.gmra.mxu0 %v326
    %v362 = vpop.f32.mrf.mxu0
    %v363 = vadd.f32 0.0, %v362
    %v364 = vpop.f32.mrf.mxu0
    %v365 = vpop.f32.mrf.mxu0
    %v366 = vpop.f32.mrf.mxu0
    %367 = vdwg.mxu0
    %369 = vset.pattern.permute.xlu0 0
    %370 = vperm.xlu0 %369, %v269
    %v371 = vpop.permute.xlu0 %370
    %v373 = vmul.f32 %v363, %v371
    %v374 = vld [vmem:[%s3] sm:$0x1]
    %v376 = vlaneseq
    %v377 = vshrl.u32 %v376, 7
    %v378 = vsub.s32 0, %v377
    %v379 = vrot.slane %v374, %v378
    %v381 = vadd.f32 %v373, %v379
    %v382 = vmax.f32 %v381, 0.0
    %v383 = vpack.c.bf16 %v382, %v382
    %v384 = vld [vmem:[#allocation5] sm:$0xf]
    %v385 = vld [vmem:[#allocation5 + $0x4] sm:$0xf]
    %v386 = vld [vmem:[#allocation5 + $0x8] sm:$0xf]
    %v387 = vld [vmem:[#allocation5 + $0xc] sm:$0xf]
    %v388 = vld [vmem:[%s5] sm:$0x1]
    %v390 = vlaneseq
    %v391 = vshrl.u32 %v390, 7
    %v392 = vsub.s32 0, %v391
    %v393 = vrot.slane %v388, %v392
    %v399 = vunpack.c.l.b16 %v384
    %v400 = vunpack.c.l.b16 %v385
    %v401 = vunpack.c.l.b16 %v386
    %v402 = vunpack.c.l.b16 %v387
    %v403 = vpack.c.b16 %v400, %v399
    %v404 = vpack.c.b16 %v402, %v401
    %v408 = vsel %vm209, %v383, 0
    %410 = vmatprep.subr.bf16.mxu0 0
    %411 = vmatpush1.bf16.msra.mxu0 0
    %412 = vmatprep.subr.bf16.mxu0 0
    %413 = vmatpush1.bf16.msra.mxu0 0
    %414 = vmatprep.subr.bf16.mxu0 0
    %415 = vmatpush1.bf16.msra.mxu0 0
    %416 = vmatprep.subr.bf16.mxu0 0
    %417 = vmatpush1.bf16.msra.mxu0 0
    %418 = vmatprep.subr.bf16.mxu0 0
    %419 = vmatpush1.bf16.msra.mxu0 0
    %420 = vmatprep.subr.bf16.mxu0 0
    %421 = vmatpush1.bf16.msra.mxu0 0
    %422 = vmatprep.subr.bf16.mxu0 0
    %423 = vmatpush1.bf16.msra.mxu0 %v404
    %424 = vmatprep.subr.bf16.mxu0 0
    %425 = vmatpush1.bf16.msra.mxu0 %v403
    %426 = vmatprep.subr.bf16.mxu0 0
    %427 = vmatpush2.bf16.msra.mxu0 0
    %428 = vmatprep.subr.bf16.mxu0 0
    %429 = vmatpush2.bf16.msra.mxu0 0
    %430 = vmatprep.subr.bf16.mxu0 0
    %431 = vmatpush2.bf16.msra.mxu0 0
    %432 = vmatprep.subr.bf16.mxu0 0
    %433 = vmatpush2.bf16.msra.mxu0 0
    %434 = vmatprep.subr.bf16.mxu0 0
    %435 = vmatpush2.bf16.msra.mxu0 0
    %436 = vmatprep.subr.bf16.mxu0 0
    %437 = vmatpush2.bf16.msra.mxu0 0
    %438 = vmatprep.subr.bf16.mxu0 0
    %439 = vmatpush2.bf16.msra.mxu0 0
    %440 = vmatprep.subr.bf16.mxu0 0
    %441 = vmatpush2.bf16.msra.mxu0 0
    %442 = vmatprep.mubr.bf16.mxu0 0
    %443 = vmatmul.mubr.bf16.gmra.mxu0 %v408
    %v444 = vpop.f32.mrf.mxu0
    %v445 = vadd.f32 %v393, %v444
    %v446 = vpop.f32.mrf.mxu0
    %v447 = vpop.f32.mrf.mxu0
    %v448 = vpop.f32.mrf.mxu0
    %449 = vdwg.mxu0
    %v450 = vmax.f32 %v445, 0.0
    %v451 = vpack.c.bf16 %v450, %v450
    %v452 = vld [vmem:[#allocation7] sm:$0xf]
    %v453 = vld [vmem:[#allocation7 + $0x4] sm:$0xf]
    %v454 = vld [vmem:[#allocation7 + $0x8] sm:$0xf]
    %v455 = vld [vmem:[#allocation7 + $0xc] sm:$0xf]
    %v456 = vld [vmem:[%s7] sm:$0x1]
    %v458 = vlaneseq
    %v459 = vshrl.u32 %v458, 7
    %v460 = vsub.s32 0, %v459
    %v461 = vrot.slane %v456, %v460
    %v467 = vunpack.c.l.b16 %v452
    %v468 = vunpack.c.l.b16 %v453
    %v469 = vunpack.c.l.b16 %v454
    %v470 = vunpack.c.l.b16 %v455
    %v471 = vpack.c.b16 %v468, %v467
    %v472 = vpack.c.b16 %v470, %v469
    %v476 = vsel %vm209, %v451, 0
    %478 = vmatprep.subr.bf16.mxu0 0
    %479 = vmatpush1.bf16.msra.mxu0 0
    %480 = vmatprep.subr.bf16.mxu0 0
    %481 = vmatpush1.bf16.msra.mxu0 0
    %482 = vmatprep.subr.bf16.mxu0 0
    %483 = vmatpush1.bf16.msra.mxu0 0
    %484 = vmatprep.subr.bf16.mxu0 0
    %485 = vmatpush1.bf16.msra.mxu0 0
    %486 = vmatprep.subr.bf16.mxu0 0
    %487 = vmatpush1.bf16.msra.mxu0 0
    %488 = vmatprep.subr.bf16.mxu0 0
    %489 = vmatpush1.bf16.msra.mxu0 0
    %490 = vmatprep.subr.bf16.mxu0 0
    %491 = vmatpush1.bf16.msra.mxu0 %v472
    %492 = vmatprep.subr.bf16.mxu0 0
    %493 = vmatpush1.bf16.msra.mxu0 %v471
    %494 = vmatprep.subr.bf16.mxu0 0
    %495 = vmatpush2.bf16.msra.mxu0 0
    %496 = vmatprep.subr.bf16.mxu0 0
    %497 = vmatpush2.bf16.msra.mxu0 0
    %498 = vmatprep.subr.bf16.mxu0 0
    %499 = vmatpush2.bf16.msra.mxu0 0
    %500 = vmatprep.subr.bf16.mxu0 0
    %501 = vmatpush2.bf16.msra.mxu0 0
    %502 = vmatprep.subr.bf16.mxu0 0
    %503 = vmatpush2.bf16.msra.mxu0 0
    %504 = vmatprep.subr.bf16.mxu0 0
    %505 = vmatpush2.bf16.msra.mxu0 0
    %506 = vmatprep.subr.bf16.mxu0 0
    %507 = vmatpush2.bf16.msra.mxu0 0
    %508 = vmatprep.subr.bf16.mxu0 0
    %509 = vmatpush2.bf16.msra.mxu0 0
    %510 = vmatprep.mubr.bf16.mxu0 0
    %511 = vmatmul.mubr.bf16.gmra.mxu0 %v476
    %v512 = vpop.f32.mrf.mxu0
    %v513 = vadd.f32 %v461, %v512
    %v514 = vpop.f32.mrf.mxu0
    %v515 = vpop.f32.mrf.mxu0
    %v516 = vpop.f32.mrf.mxu0
    %517 = vdwg.mxu0
    %v518 = vmax.f32 %v513, 0.0
    %v519 = vpack.c.bf16 %v518, %v518
    %v520 = vld [vmem:[#allocation8] sm:$0xf]
    %v521 = vld [vmem:[#allocation8 + $0x4] sm:$0xf]
    %v522 = vld [vmem:[#allocation8 + $0x8] sm:$0xf]
    %v523 = vld [vmem:[#allocation8 + $0xc] sm:$0xf]
    %v524 = vld [vmem:[%s9] sm:$0x1]
    %v526 = vlaneseq
    %v527 = vshrl.u32 %v526, 7
    %v528 = vsub.s32 0, %v527
    %v529 = vrot.slane %v524, %v528
    %v535 = vunpack.c.l.b16 %v520
    %v536 = vunpack.c.l.b16 %v521
    %v537 = vunpack.c.l.b16 %v522
    %v538 = vunpack.c.l.b16 %v523
    %v539 = vpack.c.b16 %v536, %v535
    %v540 = vpack.c.b16 %v538, %v537
    %v544 = vsel %vm209, %v519, 0
    %546 = vmatprep.subr.bf16.mxu0 0
    %547 = vmatpush1.bf16.msra.mxu0 0
    %548 = vmatprep.subr.bf16.mxu0 0
    %549 = vmatpush1.bf16.msra.mxu0 0
    %550 = vmatprep.subr.bf16.mxu0 0
    %551 = vmatpush1.bf16.msra.mxu0 0
    %552 = vmatprep.subr.bf16.mxu0 0
    %553 = vmatpush1.bf16.msra.mxu0 0
    %554 = vmatprep.subr.bf16.mxu0 0
    %555 = vmatpush1.bf16.msra.mxu0 0
    %556 = vmatprep.subr.bf16.mxu0 0
    %557 = vmatpush1.bf16.msra.mxu0 0
    %558 = vmatprep.subr.bf16.mxu0 0
    %559 = vmatpush1.bf16.msra.mxu0 %v540
    %560 = vmatprep.subr.bf16.mxu0 0
    %561 = vmatpush1.bf16.msra.mxu0 %v539
    %562 = vmatprep.subr.bf16.mxu0 0
    %563 = vmatpush2.bf16.msra.mxu0 0
    %564 = vmatprep.subr.bf16.mxu0 0
    %565 = vmatpush2.bf16.msra.mxu0 0
    %566 = vmatprep.subr.bf16.mxu0 0
    %567 = vmatpush2.bf16.msra.mxu0 0
    %568 = vmatprep.subr.bf16.mxu0 0
    %569 = vmatpush2.bf16.msra.mxu0 0
    %570 = vmatprep.subr.bf16.mxu0 0
    %571 = vmatpush2.bf16.msra.mxu0 0
    %572 = vmatprep.subr.bf16.mxu0 0
    %573 = vmatpush2.bf16.msra.mxu0 0
    %574 = vmatprep.subr.bf16.mxu0 0
    %575 = vmatpush2.bf16.msra.mxu0 0
    %576 = vmatprep.subr.bf16.mxu0 0
    %577 = vmatpush2.bf16.msra.mxu0 0
    %578 = vmatprep.mubr.bf16.mxu0 0
    %579 = vmatmul.mubr.bf16.gmra.mxu0 %v544
    %v580 = vpop.f32.mrf.mxu0
    %v581 = vadd.f32 %v529, %v580
    %v582 = vpop.f32.mrf.mxu0
    %v583 = vpop.f32.mrf.mxu0
    %v584 = vpop.f32.mrf.mxu0
    %585 = vdwg.mxu0
    %v586 = vmax.f32 %v581, 0.0
    %v587 = vpack.c.bf16 %v586, %v586
    %v588 = vld [vmem:[#allocation11] sm:$0xf]
    %v589 = vld [vmem:[#allocation11 + $0x4] sm:$0xf]
    %v590 = vld [vmem:[#allocation11 + $0x8] sm:$0xf]
    %v591 = vld [vmem:[#allocation11 + $0xc] sm:$0xf]
    %v592 = vld [vmem:[%s12] sm:$0x1]
    %v594 = vlaneseq
    %v595 = vshrl.u32 %v594, 7
    %v596 = vsub.s32 0, %v595
    %v597 = vrot.slane %v592, %v596
    %v603 = vunpack.c.l.b16 %v588
    %v604 = vunpack.c.l.b16 %v589
    %v605 = vunpack.c.l.b16 %v590
    %v606 = vunpack.c.l.b16 %v591
    %v607 = vpack.c.b16 %v604, %v603
    %v608 = vpack.c.b16 %v606, %v605
    %v612 = vsel %vm209, %v587, 0
    %614 = vmatprep.subr.bf16.mxu0 0
    %615 = vmatpush1.bf16.msra.mxu0 0
    %616 = vmatprep.subr.bf16.mxu0 0
    %617 = vmatpush1.bf16.msra.mxu0 0
    %618 = vmatprep.subr.bf16.mxu0 0
    %619 = vmatpush1.bf16.msra.mxu0 0
    %620 = vmatprep.subr.bf16.mxu0 0
    %621 = vmatpush1.bf16.msra.mxu0 0
    %622 = vmatprep.subr.bf16.mxu0 0
    %623 = vmatpush1.bf16.msra.mxu0 0
    %624 = vmatprep.subr.bf16.mxu0 0
    %625 = vmatpush1.bf16.msra.mxu0 0
    %626 = vmatprep.subr.bf16.mxu0 0
    %627 = vmatpush1.bf16.msra.mxu0 %v608
    %628 = vmatprep.subr.bf16.mxu0 0
    %629 = vmatpush1.bf16.msra.mxu0 %v607
    %630 = vmatprep.subr.bf16.mxu0 0
    %631 = vmatpush2.bf16.msra.mxu0 0
    %632 = vmatprep.subr.bf16.mxu0 0
    %633 = vmatpush2.bf16.msra.mxu0 0
    %634 = vmatprep.subr.bf16.mxu0 0
    %635 = vmatpush2.bf16.msra.mxu0 0
    %636 = vmatprep.subr.bf16.mxu0 0
    %637 = vmatpush2.bf16.msra.mxu0 0
    %638 = vmatprep.subr.bf16.mxu0 0
    %639 = vmatpush2.bf16.msra.mxu0 0
    %640 = vmatprep.subr.bf16.mxu0 0
    %641 = vmatpush2.bf16.msra.mxu0 0
    %642 = vmatprep.subr.bf16.mxu0 0
    %643 = vmatpush2.bf16.msra.mxu0 0
    %644 = vmatprep.subr.bf16.mxu0 0
    %645 = vmatpush2.bf16.msra.mxu0 0
    %646 = vmatprep.mubr.bf16.mxu0 0
    %647 = vmatmul.mubr.bf16.gmra.mxu0 %v612
    %v648 = vpop.f32.mrf.mxu0
    %v649 = vadd.f32 %v597, %v648
    %v650 = vpop.f32.mrf.mxu0
    %v651 = vpop.f32.mrf.mxu0
    %v652 = vpop.f32.mrf.mxu0
    %653 = vdwg.mxu0
    %v654 = vld [vmem:[#allocation10] sm:$0xff]
    %v655 = vld [vmem:[#allocation10 + $0x8] sm:$0xff]
    %v656 = vld [vmem:[#allocation10 + $0x10] sm:$0xff]
    %v657 = vld [vmem:[#allocation10 + $0x18] sm:$0xff]
    %v658 = vld [vmem:[#allocation10 + $0x20] sm:$0xff]
    %v659 = vld [vmem:[#allocation10 + $0x28] sm:$0xff]
    %v660 = vld [vmem:[#allocation10 + $0x30] sm:$0xff]
    %v661 = vld [vmem:[#allocation10 + $0x38] sm:$0xff]
    %v662 = vld [vmem:[#allocation10 + $0x40] sm:$0xff]
    %v663 = vld [vmem:[#allocation10 + $0x48] sm:$0xff]
    %v664 = vld [vmem:[#allocation10 + $0x50] sm:$0xff]
    %v665 = vld [vmem:[#allocation10 + $0x58] sm:$0xff]
    %v666 = vld [vmem:[#allocation10 + $0x60] sm:$0xff]
    %v667 = vld [vmem:[#allocation10 + $0x68] sm:$0xff]
    %v668 = vld [vmem:[#allocation10 + $0x70] sm:$0xff]
    %v669 = vld [vmem:[#allocation10 + $0x78] sm:$0xff]
    %v670 = vld [vmem:[#allocation10 + $0x80] sm:$0xff]
    %v671 = vld [vmem:[#allocation10 + $0x88] sm:$0xff]
    %v672 = vld [vmem:[#allocation10 + $0x90] sm:$0xff]
    %v673 = vld [vmem:[#allocation10 + $0x98] sm:$0xff]
    %v674 = vld [vmem:[#allocation10 + $0xa0] sm:$0xff]
    %v675 = vld [vmem:[#allocation10 + $0xa8] sm:$0xff]
    %v676 = vld [vmem:[#allocation10 + $0xb0] sm:$0xff]
    %v677 = vld [vmem:[#allocation10 + $0xb8] sm:$0xff]
    %v678 = vld [vmem:[#allocation10 + $0xc0] sm:$0xff]
    %v679 = vld [vmem:[#allocation10 + $0xc8] sm:$0xff]
    %v680 = vld [vmem:[#allocation10 + $0xd0] sm:$0xff]
    %v681 = vld [vmem:[#allocation10 + $0xd8] sm:$0xff]
    %v682 = vld [vmem:[#allocation10 + $0xe0] sm:$0xff]
    %v683 = vld [vmem:[#allocation10 + $0xe8] sm:$0xff]
    %v684 = vld [vmem:[#allocation10 + $0xf0] sm:$0xff]
    %v685 = vld [vmem:[#allocation10 + $0xf8] sm:$0xff]
    %v718 = vunpack.c.l.b16 %v654
    %v719 = vunpack.c.h.b16 %v654
    %v720 = vunpack.c.l.b16 %v655
    %v721 = vunpack.c.h.b16 %v655
    %v722 = vunpack.c.l.b16 %v656
    %v723 = vunpack.c.h.b16 %v656
    %v724 = vunpack.c.l.b16 %v657
    %v725 = vunpack.c.h.b16 %v657
    %v726 = vunpack.c.l.b16 %v658
    %v727 = vunpack.c.h.b16 %v658
    %v728 = vunpack.c.l.b16 %v659
    %v729 = vunpack.c.h.b16 %v659
    %v730 = vunpack.c.l.b16 %v660
    %v731 = vunpack.c.h.b16 %v660
    %v732 = vunpack.c.l.b16 %v661
    %v733 = vunpack.c.h.b16 %v661
    %v734 = vunpack.c.l.b16 %v662
    %v735 = vunpack.c.h.b16 %v662
    %v736 = vunpack.c.l.b16 %v663
    %v737 = vunpack.c.h.b16 %v663
    %v738 = vunpack.c.l.b16 %v664
    %v739 = vunpack.c.h.b16 %v664
    %v740 = vunpack.c.l.b16 %v665
    %v741 = vunpack.c.h.b16 %v665
    %v742 = vunpack.c.l.b16 %v666
    %v743 = vunpack.c.h.b16 %v666
    %v744 = vunpack.c.l.b16 %v667
    %v745 = vunpack.c.h.b16 %v667
    %v746 = vunpack.c.l.b16 %v668
    %v747 = vunpack.c.h.b16 %v668
    %v748 = vunpack.c.l.b16 %v669
    %v749 = vunpack.c.h.b16 %v669
    %v750 = vunpack.c.l.b16 %v670
    %v751 = vunpack.c.h.b16 %v670
    %v752 = vunpack.c.l.b16 %v671
    %v753 = vunpack.c.h.b16 %v671
    %v754 = vunpack.c.l.b16 %v672
    %v755 = vunpack.c.h.b16 %v672
    %v756 = vunpack.c.l.b16 %v673
    %v757 = vunpack.c.h.b16 %v673
    %v758 = vunpack.c.l.b16 %v674
    %v759 = vunpack.c.h.b16 %v674
    %v760 = vunpack.c.l.b16 %v675
    %v761 = vunpack.c.h.b16 %v675
    %v762 = vunpack.c.l.b16 %v676
    %v763 = vunpack.c.h.b16 %v676
    %v764 = vunpack.c.l.b16 %v677
    %v765 = vunpack.c.h.b16 %v677
    %v766 = vunpack.c.l.b16 %v678
    %v767 = vunpack.c.h.b16 %v678
    %v768 = vunpack.c.l.b16 %v679
    %v769 = vunpack.c.h.b16 %v679
    %v770 = vunpack.c.l.b16 %v680
    %v771 = vunpack.c.h.b16 %v680
    %v772 = vunpack.c.l.b16 %v681
    %v773 = vunpack.c.h.b16 %v681
    %v774 = vunpack.c.l.b16 %v682
    %v775 = vunpack.c.h.b16 %v682
    %v776 = vunpack.c.l.b16 %v683
    %v777 = vunpack.c.h.b16 %v683
    %v778 = vunpack.c.l.b16 %v684
    %v779 = vunpack.c.h.b16 %v684
    %v780 = vunpack.c.l.b16 %v685
    %v781 = vunpack.c.h.b16 %v685
    %v782 = vpack.c.b16 %v734, %v718
    %v783 = vpack.c.b16 %v735, %v719
    %v784 = vpack.c.b16 %v736, %v720
    %v785 = vpack.c.b16 %v737, %v721
    %v786 = vpack.c.b16 %v738, %v722
    %v787 = vpack.c.b16 %v739, %v723
    %v788 = vpack.c.b16 %v740, %v724
    %v789 = vpack.c.b16 %v741, %v725
    %v790 = vpack.c.b16 %v742, %v726
    %v791 = vpack.c.b16 %v743, %v727
    %v792 = vpack.c.b16 %v744, %v728
    %v793 = vpack.c.b16 %v745, %v729
    %v794 = vpack.c.b16 %v746, %v730
    %v795 = vpack.c.b16 %v747, %v731
    %v796 = vpack.c.b16 %v748, %v732
    %v797 = vpack.c.b16 %v749, %v733
    %v798 = vpack.c.b16 %v766, %v750
    %v799 = vpack.c.b16 %v767, %v751
    %v800 = vpack.c.b16 %v768, %v752
    %v801 = vpack.c.b16 %v769, %v753
    %v802 = vpack.c.b16 %v770, %v754
    %v803 = vpack.c.b16 %v771, %v755
    %v804 = vpack.c.b16 %v772, %v756
    %v805 = vpack.c.b16 %v773, %v757
    %v806 = vpack.c.b16 %v774, %v758
    %v807 = vpack.c.b16 %v775, %v759
    %v808 = vpack.c.b16 %v776, %v760
    %v809 = vpack.c.b16 %v777, %v761
    %v810 = vpack.c.b16 %v778, %v762
    %v811 = vpack.c.b16 %v779, %v763
    %v812 = vpack.c.b16 %v780, %v764
    %v813 = vpack.c.b16 %v781, %v765
    %846 = vmatprep.subr.bf16.mxu0 0
    %847 = vmatpush1.bf16.msra.mxu0 0
    %848 = vmatprep.subr.bf16.mxu0 0
    %849 = vmatpush1.bf16.msra.mxu0 0
    %850 = vmatprep.subr.bf16.mxu0 0
    %851 = vmatpush1.bf16.msra.mxu0 0
    %852 = vmatprep.subr.bf16.mxu0 0
    %853 = vmatpush1.bf16.msra.mxu0 0
    %854 = vmatprep.subr.bf16.mxu0 0
    %855 = vmatpush1.bf16.msra.mxu0 0
    %856 = vmatprep.subr.bf16.mxu0 0
    %857 = vmatpush1.bf16.msra.mxu0 0
    %858 = vmatprep.subr.bf16.mxu0 %v799
    %859 = vmatpush1.bf16.msra.mxu0 %v798
    %860 = vmatprep.subr.bf16.mxu0 %v783
    %861 = vmatpush1.bf16.msra.mxu0 %v782
    %862 = vmatprep.subr.bf16.mxu0 0
    %863 = vmatpush2.bf16.msra.mxu0 0
    %864 = vmatprep.subr.bf16.mxu0 0
    %865 = vmatpush2.bf16.msra.mxu0 0
    %866 = vmatprep.subr.bf16.mxu0 0
    %867 = vmatpush2.bf16.msra.mxu0 0
    %868 = vmatprep.subr.bf16.mxu0 0
    %869 = vmatpush2.bf16.msra.mxu0 0
    %870 = vmatprep.subr.bf16.mxu0 0
    %871 = vmatpush2.bf16.msra.mxu0 0
    %872 = vmatprep.subr.bf16.mxu0 0
    %873 = vmatpush2.bf16.msra.mxu0 0
    %874 = vmatprep.subr.bf16.mxu0 0
    %875 = vmatpush2.bf16.msra.mxu0 0
    %876 = vmatprep.subr.bf16.mxu0 0
    %877 = vmatpush2.bf16.msra.mxu0 0
    %878 = vmatprep.mubr.bf16.mxu0 0
    %879 = vmatmul.mubr.bf16.gmra.mxu0 %v476
    %v880 = vpop.f32.mrf.mxu0
    %v881 = vadd.f32 0.0, %v880
    %v882 = vpop.f32.mrf.mxu0
    %v883 = vadd.f32 0.0, %v882
    %v884 = vpop.f32.mrf.mxu0
    %v885 = vpop.f32.mrf.mxu0
    %886 = vdwg.mxu0
    %887 = vmatprep.subr.bf16.mxu0 0
    %888 = vmatpush1.bf16.msra.mxu0 0
    %889 = vmatprep.subr.bf16.mxu0 0
    %890 = vmatpush1.bf16.msra.mxu0 0
    %891 = vmatprep.subr.bf16.mxu0 0
    %892 = vmatpush1.bf16.msra.mxu0 0
    %893 = vmatprep.subr.bf16.mxu0 0
    %894 = vmatpush1.bf16.msra.mxu0 0
    %895 = vmatprep.subr.bf16.mxu0 0
    %896 = vmatpush1.bf16.msra.mxu0 0
    %897 = vmatprep.subr.bf16.mxu0 0
    %898 = vmatpush1.bf16.msra.mxu0 0
    %899 = vmatprep.subr.bf16.mxu0 %v801
    %900 = vmatpush1.bf16.msra.mxu0 %v800
    %901 = vmatprep.subr.bf16.mxu0 %v785
    %902 = vmatpush1.bf16.msra.mxu0 %v784
    %903 = vmatprep.subr.bf16.mxu0 0
    %904 = vmatpush2.bf16.msra.mxu0 0
    %905 = vmatprep.subr.bf16.mxu0 0
    %906 = vmatpush2.bf16.msra.mxu0 0
    %907 = vmatprep.subr.bf16.mxu0 0
    %908 = vmatpush2.bf16.msra.mxu0 0
    %909 = vmatprep.subr.bf16.mxu0 0
    %910 = vmatpush2.bf16.msra.mxu0 0
    %911 = vmatprep.subr.bf16.mxu0 0
    %912 = vmatpush2.bf16.msra.mxu0 0
    %913 = vmatprep.subr.bf16.mxu0 0
    %914 = vmatpush2.bf16.msra.mxu0 0
    %915 = vmatprep.subr.bf16.mxu0 0
    %916 = vmatpush2.bf16.msra.mxu0 0
    %917 = vmatprep.subr.bf16.mxu0 0
    %918 = vmatpush2.bf16.msra.mxu0 0
    %919 = vmatprep.mubr.bf16.mxu0 0
    %920 = vmatmul.mubr.bf16.gmra.mxu0 %v476
    %v921 = vpop.f32.mrf.mxu0
    %v922 = vadd.f32 0.0, %v921
    %v923 = vpop.f32.mrf.mxu0
    %v924 = vadd.f32 0.0, %v923
    %v925 = vpop.f32.mrf.mxu0
    %v926 = vpop.f32.mrf.mxu0
    %927 = vdwg.mxu0
    %928 = vmatprep.subr.bf16.mxu0 0
    %929 = vmatpush1.bf16.msra.mxu0 0
    %930 = vmatprep.subr.bf16.mxu0 0
    %931 = vmatpush1.bf16.msra.mxu0 0
    %932 = vmatprep.subr.bf16.mxu0 0
    %933 = vmatpush1.bf16.msra.mxu0 0
    %934 = vmatprep.subr.bf16.mxu0 0
    %935 = vmatpush1.bf16.msra.mxu0 0
    %936 = vmatprep.subr.bf16.mxu0 0
    %937 = vmatpush1.bf16.msra.mxu0 0
    %938 = vmatprep.subr.bf16.mxu0 0
    %939 = vmatpush1.bf16.msra.mxu0 0
    %940 = vmatprep.subr.bf16.mxu0 %v803
    %941 = vmatpush1.bf16.msra.mxu0 %v802
    %942 = vmatprep.subr.bf16.mxu0 %v787
    %943 = vmatpush1.bf16.msra.mxu0 %v786
    %944 = vmatprep.subr.bf16.mxu0 0
    %945 = vmatpush2.bf16.msra.mxu0 0
    %946 = vmatprep.subr.bf16.mxu0 0
    %947 = vmatpush2.bf16.msra.mxu0 0
    %948 = vmatprep.subr.bf16.mxu0 0
    %949 = vmatpush2.bf16.msra.mxu0 0
    %950 = vmatprep.subr.bf16.mxu0 0
    %951 = vmatpush2.bf16.msra.mxu0 0
    %952 = vmatprep.subr.bf16.mxu0 0
    %953 = vmatpush2.bf16.msra.mxu0 0
    %954 = vmatprep.subr.bf16.mxu0 0
    %955 = vmatpush2.bf16.msra.mxu0 0
    %956 = vmatprep.subr.bf16.mxu0 0
    %957 = vmatpush2.bf16.msra.mxu0 0
    %958 = vmatprep.subr.bf16.mxu0 0
    %959 = vmatpush2.bf16.msra.mxu0 0
    %960 = vmatprep.mubr.bf16.mxu0 0
    %961 = vmatmul.mubr.bf16.gmra.mxu0 %v476
    %v962 = vpop.f32.mrf.mxu0
    %v963 = vadd.f32 0.0, %v962
    %v964 = vpop.f32.mrf.mxu0
    %v965 = vadd.f32 0.0, %v964
    %v966 = vpop.f32.mrf.mxu0
    %v967 = vpop.f32.mrf.mxu0
    %968 = vdwg.mxu0
    %969 = vmatprep.subr.bf16.mxu0 0
    %970 = vmatpush1.bf16.msra.mxu0 0
    %971 = vmatprep.subr.bf16.mxu0 0
    %972 = vmatpush1.bf16.msra.mxu0 0
    %973 = vmatprep.subr.bf16.mxu0 0
    %974 = vmatpush1.bf16.msra.mxu0 0
    %975 = vmatprep.subr.bf16.mxu0 0
    %976 = vmatpush1.bf16.msra.mxu0 0
    %977 = vmatprep.subr.bf16.mxu0 0
    %978 = vmatpush1.bf16.msra.mxu0 0
    %979 = vmatprep.subr.bf16.mxu0 0
    %980 = vmatpush1.bf16.msra.mxu0 0
    %981 = vmatprep.subr.bf16.mxu0 %v805
    %982 = vmatpush1.bf16.msra.mxu0 %v804
    %983 = vmatprep.subr.bf16.mxu0 %v789
    %984 = vmatpush1.bf16.msra.mxu0 %v788
    %985 = vmatprep.subr.bf16.mxu0 0
    %986 = vmatpush2.bf16.msra.mxu0 0
    %987 = vmatprep.subr.bf16.mxu0 0
    %988 = vmatpush2.bf16.msra.mxu0 0
    %989 = vmatprep.subr.bf16.mxu0 0
    %990 = vmatpush2.bf16.msra.mxu0 0
    %991 = vmatprep.subr.bf16.mxu0 0
    %992 = vmatpush2.bf16.msra.mxu0 0
    %993 = vmatprep.subr.bf16.mxu0 0
    %994 = vmatpush2.bf16.msra.mxu0 0
    %995 = vmatprep.subr.bf16.mxu0 0
    %996 = vmatpush2.bf16.msra.mxu0 0
    %997 = vmatprep.subr.bf16.mxu0 0
    %998 = vmatpush2.bf16.msra.mxu0 0
    %999 = vmatprep.subr.bf16.mxu0 0
    %1000 = vmatpush2.bf16.msra.mxu0 0
    %1001 = vmatprep.mubr.bf16.mxu0 0
    %1002 = vmatmul.mubr.bf16.gmra.mxu0 %v476
    %v1003 = vpop.f32.mrf.mxu0
    %v1004 = vadd.f32 0.0, %v1003
    %v1005 = vpop.f32.mrf.mxu0
    %v1006 = vadd.f32 0.0, %v1005
    %v1007 = vpop.f32.mrf.mxu0
    %v1008 = vpop.f32.mrf.mxu0
    %1009 = vdwg.mxu0
    %1010 = vmatprep.subr.bf16.mxu0 0
    %1011 = vmatpush1.bf16.msra.mxu0 0
    %1012 = vmatprep.subr.bf16.mxu0 0
    %1013 = vmatpush1.bf16.msra.mxu0 0
    %1014 = vmatprep.subr.bf16.mxu0 0
    %1015 = vmatpush1.bf16.msra.mxu0 0
    %1016 = vmatprep.subr.bf16.mxu0 0
    %1017 = vmatpush1.bf16.msra.mxu0 0
    %1018 = vmatprep.subr.bf16.mxu0 0
    %1019 = vmatpush1.bf16.msra.mxu0 0
    %1020 = vmatprep.subr.bf16.mxu0 0
    %1021 = vmatpush1.bf16.msra.mxu0 0
    %1022 = vmatprep.subr.bf16.mxu0 %v807
    %1023 = vmatpush1.bf16.msra.mxu0 %v806
    %1024 = vmatprep.subr.bf16.mxu0 %v791
    %1025 = vmatpush1.bf16.msra.mxu0 %v790
    %1026 = vmatprep.subr.bf16.mxu0 0
    %1027 = vmatpush2.bf16.msra.mxu0 0
    %1028 = vmatprep.subr.bf16.mxu0 0
    %1029 = vmatpush2.bf16.msra.mxu0 0
    %1030 = vmatprep.subr.bf16.mxu0 0
    %1031 = vmatpush2.bf16.msra.mxu0 0
    %1032 = vmatprep.subr.bf16.mxu0 0
    %1033 = vmatpush2.bf16.msra.mxu0 0
    %1034 = vmatprep.subr.bf16.mxu0 0
    %1035 = vmatpush2.bf16.msra.mxu0 0
    %1036 = vmatprep.subr.bf16.mxu0 0
    %1037 = vmatpush2.bf16.msra.mxu0 0
    %1038 = vmatprep.subr.bf16.mxu0 0
    %1039 = vmatpush2.bf16.msra.mxu0 0
    %1040 = vmatprep.subr.bf16.mxu0 0
    %1041 = vmatpush2.bf16.msra.mxu0 0
    %1042 = vmatprep.mubr.bf16.mxu0 0
    %1043 = vmatmul.mubr.bf16.gmra.mxu0 %v476
    %v1044 = vpop.f32.mrf.mxu0
    %v1045 = vadd.f32 0.0, %v1044
    %v1046 = vpop.f32.mrf.mxu0
    %v1047 = vadd.f32 0.0, %v1046
    %v1048 = vpop.f32.mrf.mxu0
    %v1049 = vpop.f32.mrf.mxu0
    %1050 = vdwg.mxu0
    %1051 = vmatprep.subr.bf16.mxu0 0
    %1052 = vmatpush1.bf16.msra.mxu0 0
    %1053 = vmatprep.subr.bf16.mxu0 0
    %1054 = vmatpush1.bf16.msra.mxu0 0
    %1055 = vmatprep.subr.bf16.mxu0 0
    %1056 = vmatpush1.bf16.msra.mxu0 0
    %1057 = vmatprep.subr.bf16.mxu0 0
    %1058 = vmatpush1.bf16.msra.mxu0 0
    %1059 = vmatprep.subr.bf16.mxu0 0
    %1060 = vmatpush1.bf16.msra.mxu0 0
    %1061 = vmatprep.subr.bf16.mxu0 0
    %1062 = vmatpush1.bf16.msra.mxu0 0
    %1063 = vmatprep.subr.bf16.mxu0 %v809
    %1064 = vmatpush1.bf16.msra.mxu0 %v808
    %1065 = vmatprep.subr.bf16.mxu0 %v793
    %1066 = vmatpush1.bf16.msra.mxu0 %v792
    %1067 = vmatprep.subr.bf16.mxu0 0
    %1068 = vmatpush2.bf16.msra.mxu0 0
    %1069 = vmatprep.subr.bf16.mxu0 0
    %1070 = vmatpush2.bf16.msra.mxu0 0
    %1071 = vmatprep.subr.bf16.mxu0 0
    %1072 = vmatpush2.bf16.msra.mxu0 0
    %1073 = vmatprep.subr.bf16.mxu0 0
    %1074 = vmatpush2.bf16.msra.mxu0 0
    %1075 = vmatprep.subr.bf16.mxu0 0
    %1076 = vmatpush2.bf16.msra.mxu0 0
    %1077 = vmatprep.subr.bf16.mxu0 0
    %1078 = vmatpush2.bf16.msra.mxu0 0
    %1079 = vmatprep.subr.bf16.mxu0 0
    %1080 = vmatpush2.bf16.msra.mxu0 0
    %1081 = vmatprep.subr.bf16.mxu0 0
    %1082 = vmatpush2.bf16.msra.mxu0 0
    %1083 = vmatprep.mubr.bf16.mxu0 0
    %1084 = vmatmul.mubr.bf16.gmra.mxu0 %v476
    %v1085 = vpop.f32.mrf.mxu0
    %v1086 = vadd.f32 0.0, %v1085
    %v1087 = vpop.f32.mrf.mxu0
    %v1088 = vadd.f32 0.0, %v1087
    %v1089 = vpop.f32.mrf.mxu0
    %v1090 = vpop.f32.mrf.mxu0
    %1091 = vdwg.mxu0
    %1092 = vmatprep.subr.bf16.mxu0 0
    %1093 = vmatpush1.bf16.msra.mxu0 0
    %1094 = vmatprep.subr.bf16.mxu0 0
    %1095 = vmatpush1.bf16.msra.mxu0 0
    %1096 = vmatprep.subr.bf16.mxu0 0
    %1097 = vmatpush1.bf16.msra.mxu0 0
    %1098 = vmatprep.subr.bf16.mxu0 0
    %1099 = vmatpush1.bf16.msra.mxu0 0
    %1100 = vmatprep.subr.bf16.mxu0 0
    %1101 = vmatpush1.bf16.msra.mxu0 0
    %1102 = vmatprep.subr.bf16.mxu0 0
    %1103 = vmatpush1.bf16.msra.mxu0 0
    %1104 = vmatprep.subr.bf16.mxu0 %v811
    %1105 = vmatpush1.bf16.msra.mxu0 %v810
    %1106 = vmatprep.subr.bf16.mxu0 %v795
    %1107 = vmatpush1.bf16.msra.mxu0 %v794
    %1108 = vmatprep.subr.bf16.mxu0 0
    %1109 = vmatpush2.bf16.msra.mxu0 0
    %1110 = vmatprep.subr.bf16.mxu0 0
    %1111 = vmatpush2.bf16.msra.mxu0 0
    %1112 = vmatprep.subr.bf16.mxu0 0
    %1113 = vmatpush2.bf16.msra.mxu0 0
    %1114 = vmatprep.subr.bf16.mxu0 0
    %1115 = vmatpush2.bf16.msra.mxu0 0
    %1116 = vmatprep.subr.bf16.mxu0 0
    %1117 = vmatpush2.bf16.msra.mxu0 0
    %1118 = vmatprep.subr.bf16.mxu0 0
    %1119 = vmatpush2.bf16.msra.mxu0 0
    %1120 = vmatprep.subr.bf16.mxu0 0
    %1121 = vmatpush2.bf16.msra.mxu0 0
    %1122 = vmatprep.subr.bf16.mxu0 0
    %1123 = vmatpush2.bf16.msra.mxu0 0
    %1124 = vmatprep.mubr.bf16.mxu0 0
    %1125 = vmatmul.mubr.bf16.gmra.mxu0 %v476
    %v1126 = vpop.f32.mrf.mxu0
    %v1127 = vadd.f32 0.0, %v1126
    %v1128 = vpop.f32.mrf.mxu0
    %v1129 = vadd.f32 0.0, %v1128
    %v1130 = vpop.f32.mrf.mxu0
    %v1131 = vpop.f32.mrf.mxu0
    %1132 = vdwg.mxu0
    %1133 = vmatprep.subr.bf16.mxu0 0
    %1134 = vmatpush1.bf16.msra.mxu0 0
    %1135 = vmatprep.subr.bf16.mxu0 0
    %1136 = vmatpush1.bf16.msra.mxu0 0
    %1137 = vmatprep.subr.bf16.mxu0 0
    %1138 = vmatpush1.bf16.msra.mxu0 0
    %1139 = vmatprep.subr.bf16.mxu0 0
    %1140 = vmatpush1.bf16.msra.mxu0 0
    %1141 = vmatprep.subr.bf16.mxu0 0
    %1142 = vmatpush1.bf16.msra.mxu0 0
    %1143 = vmatprep.subr.bf16.mxu0 0
    %1144 = vmatpush1.bf16.msra.mxu0 0
    %1145 = vmatprep.subr.bf16.mxu0 %v813
    %1146 = vmatpush1.bf16.msra.mxu0 %v812
    %1147 = vmatprep.subr.bf16.mxu0 %v797
    %1148 = vmatpush1.bf16.msra.mxu0 %v796
    %1149 = vmatprep.subr.bf16.mxu0 0
    %1150 = vmatpush2.bf16.msra.mxu0 0
    %1151 = vmatprep.subr.bf16.mxu0 0
    %1152 = vmatpush2.bf16.msra.mxu0 0
    %1153 = vmatprep.subr.bf16.mxu0 0
    %1154 = vmatpush2.bf16.msra.mxu0 0
    %1155 = vmatprep.subr.bf16.mxu0 0
    %1156 = vmatpush2.bf16.msra.mxu0 0
    %1157 = vmatprep.subr.bf16.mxu0 0
    %1158 = vmatpush2.bf16.msra.mxu0 0
    %1159 = vmatprep.subr.bf16.mxu0 0
    %1160 = vmatpush2.bf16.msra.mxu0 0
    %1161 = vmatprep.subr.bf16.mxu0 0
    %1162 = vmatpush2.bf16.msra.mxu0 0
    %1163 = vmatprep.subr.bf16.mxu0 0
    %1164 = vmatpush2.bf16.msra.mxu0 0
    %1165 = vmatprep.mubr.bf16.mxu0 0
    %1166 = vmatmul.mubr.bf16.gmra.mxu0 %v476
    %v1167 = vpop.f32.mrf.mxu0
    %v1168 = vadd.f32 0.0, %v1167
    %v1169 = vpop.f32.mrf.mxu0
    %v1170 = vadd.f32 0.0, %v1169
    %v1171 = vpop.f32.mrf.mxu0
    %v1172 = vpop.f32.mrf.mxu0
    %1173 = vdwg.mxu0
    %v1174 = vmul.f32 %v881, %v1045
    %v1175 = vmul.f32 %v883, %v1047
    %v1176 = vmul.f32 %v922, %v1086
    %v1177 = vmul.f32 %v924, %v1088
    %v1178 = vmul.f32 %v963, %v1127
    %v1179 = vmul.f32 %v965, %v1129
    %v1180 = vmul.f32 %v1004, %v1168
    %v1181 = vmul.f32 %v1006, %v1170
    %v1182 = vadd.f32 %v1174, %v1175
    %v1183 = vadd.f32 %v1176, %v1177
    %v1184 = vadd.f32 %v1178, %v1179
    %v1185 = vadd.f32 %v1180, %v1181
    %v1186 = vadd.f32 %v1182, %v1183
    %v1187 = vadd.f32 %v1184, %v1185
    %v1188 = vadd.f32 %v1186, %v1187
    %1189 = vrot.lane.b32.xlu0 %v1188, 64
    %v1190 = vpop.permute.xlu0 %1189
    %v1191 = vadd.f32 %v1188, %v1190
    %1192 = vrot.lane.b32.xlu0 %v1191, 32
    %v1193 = vpop.permute.xlu0 %1192
    %v1194 = vadd.f32 %v1191, %v1193
    %vm1195 = vcmp.lt.s32.totalorder %v128, 32
    %v1196 = vsel %vm1195, %v1194, 0.0
    %v1197 = vadd.f32 %v649, %v1196
    %1198 = vst [vmem:[#allocation13] sm:$0xff] %v1197
    // Predicated region
    $region78: #{kitchenette_forward.1} parent=1 // pred_check
      _
    $region79: #{kitchenette_forward.1} parent=1 // pred_check_branch
      %1200 = sbr.rel (0) target = $region81
    $region80: #{kitchenette_forward.1} parent=1 // pred_region
      %s1202 = ssub.s32 128, 128
      %1203 = vsyncadd [#allocation4], %s1202
      %s1205 = sshll.u32 [#allocation13], 4
      %s1206 = int_to_ptr.vmem [resolvable:$true] %s1205
      %1208 = dma.vmem_to_hbm [thread:$0]  %s1206, 128, %s13, [#allocation4]
    $region81: #{kitchenette_forward.1} parent=1 // pred_fallthru
      _
    // Predicated region
    $region82: #{kitchenette_forward.1} parent=1 // pred_check
      _
    $region83: #{kitchenette_forward.1} parent=1 // pred_check_branch
      %1210 = sbr.rel (0) target = $region85
    $region84: #{kitchenette_forward.1} parent=1 // pred_region
      %1211 = dma.done [#allocation4], 128
    $region85: #{kitchenette_forward.1} parent=1 // pred_fallthru
      _
    %1212 = vsyncpa [#allocation3], 1
    %1213 = vsyncpa [#allocation6], 1
    %1214 = vsyncpa [#allocation9], 1
    %1215 = vsyncpa [#allocation12], 1
    %1216 = vsyncpa [#allocation4], 1

</llo_original>
